<compile_context>
chip_gen: v6e
topology: v6e:2x2x1
jax: 0.10.0
libtpu: 0.0.40
codegen_flags: <defaults>
</compile_context>

<pallas_src>
import functools
import math

import jax
import jax.numpy as jnp
from jax.experimental import pallas as pl
from jax.experimental.pallas import tpu as pltpu


def _rmsnorm_kernel(x_ref, w_ref, o_ref, *, eps, cast_to_weight_dtype):
    # Matches:
    #   variance = x.float().pow(2).mean(-1, keepdim=True)
    #   x = x * rsqrt(variance + eps)                 (f32 math)
    #   if weight.dtype in (fp16, bf16): x = x.to(weight.dtype)
    #   out = weight * x
    x_f32 = x_ref[...].astype(jnp.float32)
    variance = jnp.mean(x_f32 * x_f32, axis=-1, keepdims=True)
    normed = x_f32 * jax.lax.rsqrt(variance + jnp.float32(eps))
    w = w_ref[...]                                    # (1, hidden) -> broadcast over rows
    if cast_to_weight_dtype:
        normed = normed.astype(w.dtype)
    o_ref[...] = (w * normed).astype(o_ref.dtype)


def _vmem_capacity_bytes():
    try:
        return int(pltpu.get_tpu_info().vmem_capacity_bytes)
    except Exception:
        return 64 << 20  # conservative fallback (v7x per-TC VMEM)


def _pick_block_rows(rows, hidden, in_itemsize, out_itemsize, w_bytes, budget):
    # Double-buffered input + output tiles dominate VMEM use.
    per_row = 2 * hidden * (in_itemsize + out_itemsize)
    avail = max(budget - 2 * w_bytes, per_row * 8)
    block = (avail // per_row) // 8 * 8
    block = int(max(8, min(block, 1024)))             # sweep-informed cap
    if rows <= block:
        return rows                                   # full row extent (always legal)
    return block                                      # multiple of 8; tail via cdiv grid


def llama_rms_norm(x, weight, eps=1e-6, *, block_rows=None):
    """x: (..., hidden), weight: (hidden,). Output dtype follows module semantics."""
    orig_shape = x.shape
    hidden = orig_shape[-1]
    assert weight.shape == (hidden,)
    rows = math.prod(orig_shape[:-1])

    x2d = x.reshape(rows, hidden)
    w2d = weight.reshape(1, hidden)                   # lane-dense 2D weight block

    w_dtype = jnp.dtype(weight.dtype)
    cast_to_weight_dtype = w_dtype in (jnp.dtype(jnp.float16), jnp.dtype(jnp.bfloat16))
    out_dtype = w_dtype if cast_to_weight_dtype else jnp.promote_types(w_dtype, jnp.float32)
    out_itemsize = jnp.dtype(out_dtype).itemsize

    capacity = _vmem_capacity_bytes()
    if block_rows is None:
        block_rows = _pick_block_rows(
            rows, hidden, x2d.dtype.itemsize, out_itemsize,
            w2d.size * w2d.dtype.itemsize, int(0.6 * capacity))
    block_rows = int(block_rows)

    grid = (pl.cdiv(rows, block_rows),)

    tile_bytes = block_rows * hidden * (x2d.dtype.itemsize + out_itemsize)
    needed = 2 * tile_bytes + 2 * w2d.size * w2d.dtype.itemsize
    vmem_limit = int(min(capacity, max(needed + (8 << 20), 32 << 20)))

    kernel = functools.partial(
        _rmsnorm_kernel, eps=eps, cast_to_weight_dtype=cast_to_weight_dtype)

    out = pl.pallas_call(
        kernel,
        out_shape=jax.ShapeDtypeStruct((rows, hidden), out_dtype),
        grid_spec=pltpu.PrefetchScalarGridSpec(
            num_scalar_prefetch=0,
            grid=grid,
            in_specs=[
                pl.BlockSpec((block_rows, hidden), lambda i: (i, 0)),
                pl.BlockSpec((1, hidden), lambda i: (0, 0)),
            ],
            out_specs=pl.BlockSpec((block_rows, hidden), lambda i: (i, 0)),
        ),
        compiler_params=pltpu.CompilerParams(
            dimension_semantics=("parallel",),
            vmem_limit_bytes=vmem_limit,
        ),
    )(x2d, w2d)
    return out.reshape(orig_shape)


def llama_rms_norm_ref(x, weight, eps=1e-6):
    x_f32 = x.astype(jnp.float32)
    variance = jnp.mean(x_f32 * x_f32, axis=-1, keepdims=True)
    normed = x_f32 * jax.lax.rsqrt(variance + jnp.float32(eps))
    w_dtype = jnp.dtype(weight.dtype)
    if w_dtype in (jnp.dtype(jnp.float16), jnp.dtype(jnp.bfloat16)):
        normed = normed.astype(w_dtype)
    return weight * normed


if __name__ == "__main__":
    key = jax.random.PRNGKey(0)
    k0, k1, k2 = jax.random.split(key, 3)

    # Case 1: f32 input / f32 weight (matches nn.Parameter(torch.ones(hidden))).
    batch, seq, hidden = 2, 8, 128
    x = jax.random.normal(k0, (batch, seq, hidden), dtype=jnp.float32)
    weight = jnp.ones((hidden,), dtype=jnp.float32)
    out = llama_rms_norm(x, weight, eps=1e-6)
    jax.block_until_ready(out)
    ref = llama_rms_norm_ref(x, weight, eps=1e-6)
    assert out.dtype == ref.dtype
    assert jnp.allclose(out, ref, atol=1e-5, rtol=1e-5), "f32 mismatch vs reference"

    # Case 2: bf16 input / bf16 weight (exercises cast-to-weight-dtype path).
    xb = jax.random.normal(k1, (batch, seq, hidden), dtype=jnp.float32).astype(jnp.bfloat16)
    wb = (1.0 + 0.1 * jax.random.normal(k2, (hidden,), dtype=jnp.float32)).astype(jnp.bfloat16)
    outb = llama_rms_norm(xb, wb, eps=1e-6)
    jax.block_until_ready(outb)
    refb = llama_rms_norm_ref(xb, wb, eps=1e-6)
    assert outb.dtype == jnp.bfloat16
    assert jnp.allclose(outb.astype(jnp.float32), refb.astype(jnp.float32),
                        atol=2e-2, rtol=2e-2), "bf16 mismatch vs reference"

    # Case 3: ragged row count with an explicit small block (partial tail block).
    xr = jax.random.normal(k1, (1, 10, hidden), dtype=jnp.float32)
    outr = llama_rms_norm(xr, weight, eps=1e-6, block_rows=8)
    jax.block_until_ready(outr)
    refr = llama_rms_norm_ref(xr, weight, eps=1e-6)
    assert jnp.allclose(outr, refr, atol=1e-5, rtol=1e-5), "ragged mismatch vs reference"

    print("KERNEL_OK")
</pallas_src>

<mosaic_0001>
module attributes {stable_mosaic.version = 11 : i64} {
  func.func @_rmsnorm_kernel(%arg0: i32, %arg1: memref<16x128xf32, #tpu.memory_space<vmem>>, %arg2: memref<1x128xf32, #tpu.memory_space<vmem>>, %arg3: memref<16x128xf32, #tpu.memory_space<vmem>>) attributes {dimension_semantics = [#tpu.dimension_semantics<parallel>], iteration_bounds = array<i64: 1>, scalar_prefetch = 0 : i64, scratch_operands = 0 : i64, tpu.core_type = #tpu.core_type<tc>, window_params = [{transform_indices = @transform_0, window_bounds = array<i64: 16, 128>}, {pipeline_mode = #tpu.pipeline_mode<synchronous>, transform_indices = @transform_1, window_bounds = array<i64: 1, 128>}, {transform_indices = @transform_2, window_bounds = array<i64: 16, 128>}]} {
    %c0 = arith.constant 0 : index
    %c0_0 = arith.constant 0 : index
    %0 = vector.load %arg1[%c0, %c0_0] : memref<16x128xf32, #tpu.memory_space<vmem>>, vector<16x128xf32>
    %1 = arith.mulf %0, %0 : vector<16x128xf32>
    %cst = arith.constant dense<0.000000e+00> : vector<16xf32>
    %2 = vector.multi_reduction <add>, %1, %cst [1] : vector<16x128xf32> to vector<16xf32>
    %3 = vector.shape_cast %2 : vector<16xf32> to vector<16x1xf32>
    %cst_1 = arith.constant 1.280000e+02 : f32
    %4 = vector.broadcast %cst_1 : f32 to vector<16x1xf32>
    %5 = arith.divf %3, %4 : vector<16x1xf32>
    %cst_2 = arith.constant 9.99999997E-7 : f32
    %6 = vector.broadcast %cst_2 : f32 to vector<16x1xf32>
    %7 = arith.addf %5, %6 : vector<16x1xf32>
    %8 = math.rsqrt %7 : vector<16x1xf32>
    %9 = vector.broadcast %8 : vector<16x1xf32> to vector<16x128xf32>
    %10 = arith.mulf %0, %9 : vector<16x128xf32>
    %c0_3 = arith.constant 0 : index
    %c0_4 = arith.constant 0 : index
    %11 = vector.load %arg2[%c0_3, %c0_4] : memref<1x128xf32, #tpu.memory_space<vmem>>, vector<1x128xf32>
    %12 = vector.broadcast %11 : vector<1x128xf32> to vector<16x128xf32>
    %13 = arith.mulf %12, %10 : vector<16x128xf32>
    %c0_5 = arith.constant 0 : index
    %c0_6 = arith.constant 0 : index
    %14 = vector.load %arg3[%c0_5, %c0_6] : memref<16x128xf32, #tpu.memory_space<vmem>>, vector<16x128xf32>
    tpu.vector_store %arg3[%c0_5, %c0_6], %13 {strides = array<i32>} : memref<16x128xf32, #tpu.memory_space<vmem>>, vector<16x128xf32>,
    return
  }
  func.func @transform_0(%arg0: i32) -> (i32, i32) {
    %c0_i32 = arith.constant 0 : i32
    %c0_i32_0 = arith.constant 0 : i32
    return %arg0, %c0_i32 : i32, i32
  }
  func.func @transform_1(%arg0: i32) -> (i32, i32) {
    %c0_i32 = arith.constant 0 : i32
    %c0_i32_0 = arith.constant 0 : i32
    %c0_i32_1 = arith.constant 0 : i32
    return %c0_i32, %c0_i32_0 : i32, i32
  }
  func.func @transform_2(%arg0: i32) -> (i32, i32) {
    %c0_i32 = arith.constant 0 : i32
    %c0_i32_0 = arith.constant 0 : i32
    return %arg0, %c0_i32 : i32, i32
  }
}

</mosaic_0001>

<llo_original>
// kernel: tpu_custom_call.1
$region0: #{tpu_custom_call.1}
  #allocation0 [shape = 'u32[]', space=smem, size = 0x4, offset = 0x4, fixed_abs, tag = 'smem constant byte address 0x4 - core index']
  #allocation1 [shape = 'u32[144,128]{1,0:T(1,128)}', space=vmem, size = 0x12000, scoped, tag = 'internal scratch']
  %s0 = inlined_call_operand.hbm [shape: f32[16,128], index: 0, kind: input, shape index: {}]
  %s1 = inlined_call_operand.vmem [shape: f32[1,128], index: 1, kind: input, shape index: {}]
  %s2 = inlined_call_operand.hbm [shape: f32[16,128], index: 2, kind: output, shape index: {}]
  %s3 = sld [smem:[#allocation0]]
  $region22: #{tpu_custom_call.1} parent=0
    _
  %s5 = ssub.s32 1, %s3
  %s6 = scalar_select 0, %s5, %s3
  $region1: #{tpu_custom_call.1} parent=0
    #allocation2 [shape = 'u8[8192]{0}', space=vmem, size = 0x2000, scoped, tag = 'input window, operand 0, single buffered']
    #allocation3 [shape = 's32[1]{0}', space=sflag, size = 0x4, scoped, tag = 'scoped memory for tpu_custom_call.1']
    #allocation4 [shape = 's32[1]{0}', space=sflag, size = 0x4, scoped, tag = 'scoped memory for tpu_custom_call.1']
    #allocation5 [shape = 'u8[8192]{0}', space=vmem, size = 0x2000, scoped, tag = 'output window, operand 0, single buffered']
    %7 = vsyncpa [#allocation3], 0
    %8 = vsyncpa [#allocation4], 0
    // Predicated region
    $region2: #{tpu_custom_call.1} parent=1 // pred_check
      _
    $region3: #{tpu_custom_call.1} parent=1 // pred_check_branch
      %10 = sbr.rel (0) target = $region5
    $region4: #{tpu_custom_call.1} parent=1 // pred_region
      %s12 = ssub.s32 256, 256
      %13 = vsyncadd [#allocation3], %s12
      %s14 = sshll.u32 [#allocation2], 4
      %s15 = int_to_ptr.vmem [resolvable:$true] %s14
      %20 = dma.hbm_to_vmem [thread:$0]  %s0, 256, %s15, [#allocation3], 128, 128, 8
    $region5: #{tpu_custom_call.1} parent=1 // pred_fallthru
      _
    // Predicated region
    $region6: #{tpu_custom_call.1} parent=1 // pred_check
      _
    $region7: #{tpu_custom_call.1} parent=1 // pred_check_branch
      %22 = sbr.rel (0) target = $region9
    $region8: #{tpu_custom_call.1} parent=1 // pred_region
      _
    $region9: #{tpu_custom_call.1} parent=1 // pred_fallthru
      _
    // Predicated region
    $region10: #{tpu_custom_call.1} parent=1 // pred_check
      _
    $region11: #{tpu_custom_call.1} parent=1 // pred_check_branch
      %24 = sbr.rel (0) target = $region13
    $region12: #{tpu_custom_call.1} parent=1 // pred_region
      %25 = dma.done [#allocation3], 256
    $region13: #{tpu_custom_call.1} parent=1 // pred_fallthru
      _
    %v26 = vld [vmem:[#allocation2] sm:$0xff]
    %v27 = vld [vmem:[#allocation2 + $0x8] sm:$0xff]
    %v28 = vmul.f32 %v26, %v26
    %v29 = vmul.f32 %v27, %v27
    %30 = vadd.xlane.f32.xlu0 %v28
    %v31 = vpop.xlane.xlu0 %30
    %32 = vadd.xlane.f32.xlu0 %v29
    %v33 = vpop.xlane.xlu0 %32
    %v34 = vrcp.pop 128.0
    %v35 = vmul.f32 %v31, %v34
    %v36 = vmul.f32 %v33, %v34
    %v37 = vadd.f32 %v35, 1e-06
    %v38 = vadd.f32 %v36, 1e-06
    %v39 = vrsqrt.pop %v37
    %v40 = vrsqrt.pop %v38
    %v41 = vmul.f32 %v26, %v39
    %v42 = vmul.f32 %v27, %v40
    %v43 = vld [vmem:[%s1] sm:$0x1]
    %v45 = vlaneseq
    %v46 = vshrl.u32 %v45, 7
    %v47 = vsub.s32 0, %v46
    %v48 = vrot.slane %v43, %v47
    %v50 = vmul.f32 %v48, %v41
    %v51 = vmul.f32 %v48, %v42
    %52 = vst [vmem:[#allocation5] sm:$0xff] %v50
    %53 = vst [vmem:[#allocation5 + $0x8] sm:$0xff] %v51
    // Predicated region
    $region14: #{tpu_custom_call.1} parent=1 // pred_check
      _
    $region15: #{tpu_custom_call.1} parent=1 // pred_check_branch
      %55 = sbr.rel (0) target = $region17
    $region16: #{tpu_custom_call.1} parent=1 // pred_region
      %s57 = ssub.s32 256, 256
      %58 = vsyncadd [#allocation4], %s57
      %s59 = sshll.u32 [#allocation5], 4
      %s60 = int_to_ptr.vmem [resolvable:$true] %s59
      %65 = dma.vmem_to_hbm [thread:$0]  %s60, 256, %s2, [#allocation4], 128, 128, 8
    $region17: #{tpu_custom_call.1} parent=1 // pred_fallthru
      _
    // Predicated region
    $region18: #{tpu_custom_call.1} parent=1 // pred_check
      _
    $region19: #{tpu_custom_call.1} parent=1 // pred_check_branch
      %67 = sbr.rel (0) target = $region21
    $region20: #{tpu_custom_call.1} parent=1 // pred_region
      %68 = dma.done [#allocation4], 256
    $region21: #{tpu_custom_call.1} parent=1 // pred_fallthru
      _
    %69 = vsyncpa [#allocation3], 1
    %70 = vsyncpa [#allocation4], 1

</llo_original>
